<compile_context>
chip_gen: v7x
topology: tpu7x:2x2x1
jax: 0.10.0
libtpu: 0.0.40
codegen_flags: <defaults>
</compile_context>

<pallas_src>
import functools
import math

import jax
import jax.numpy as jnp
from jax.experimental import pallas as pl
from jax.experimental.pallas import tpu as pltpu

ACT_PAD = 128  # lane-dense padded width of the final (action) layer


def _cdiv(a, b):
    return -(-a // b)


def _round_up(x, m):
    return ((x + m - 1) // m) * m


def _tm_cap():
    """Generation-aware batch-tile cap (v5e: smaller tiles pipeline better)."""
    try:
        kind = jax.devices()[0].device_kind.lower()
    except Exception:
        return 512
    if "v5 lite" in kind or "v5e" in kind or "v5litepod" in kind:
        return 256
    return 512


def _pick_tm(B):
    """Batch tile: >=2 grid steps (v7x TC sharding), minimal padding overshoot."""
    if B <= 8:
        return 8
    cap = _tm_cap()
    n_tiles = max(2, _cdiv(B, cap))
    return min(cap, _round_up(_cdiv(B, n_tiles), 8))


def _cost_estimate(n_nets, b, s, h1, h2):
    flops = 2 * n_nets * b * (s * h1 + h1 * h2 + h2 * ACT_PAD)
    transcendentals = n_nets * b * ACT_PAD  # tanh
    bytes_accessed = (
        n_nets * b * s * 4                                    # f32 states in
        + n_nets * (s * h1 + h1 * h2 + h2 * ACT_PAD) * 2      # bf16 weights
        + n_nets * (h1 + h2 + ACT_PAD) * 4                    # f32 biases
        + n_nets * b * ACT_PAD * 4                            # f32 output slab
    )
    return pl.CostEstimate(flops=flops, transcendentals=transcendentals,
                           bytes_accessed=bytes_accessed)


def td3_policy_kernel(x_ref, w1_ref, b1_ref, w2_ref, b2_ref, w3_ref, b3_ref, o_ref):
    """One batch tile: 3 bf16 MXU matmuls (f32 acc) + VPU relu + EUP tanh."""
    x = x_ref[...].astype(w1_ref.dtype)                       # f32 -> bf16 for MXU
    h = jnp.dot(x, w1_ref[...], preferred_element_type=jnp.float32) + b1_ref[...]
    h = jnp.maximum(h, 0.0).astype(w2_ref.dtype)               # relu (f32) -> bf16
    h = jnp.dot(h, w2_ref[...], preferred_element_type=jnp.float32) + b2_ref[...]
    h = jnp.maximum(h, 0.0).astype(w3_ref.dtype)
    out = jnp.dot(h, w3_ref[...], preferred_element_type=jnp.float32) + b3_ref[...]
    o_ref[...] = jnp.tanh(out)                                 # lane-dense (tm,128) store


def prepare_td3_params(params, compute_dtype=jnp.bfloat16):
    """One-time prep: pad fc3 to 128 lanes with exact zeros (tanh(0)=0 in the
    padded lanes) and cast weights to the MXU compute dtype.  Call at init /
    after parameter updates; keeps the per-step forward path pad-free."""
    w1, b1, w2, b2, w3, b3 = params
    h2, a = w3.shape
    w3p = jnp.zeros((h2, ACT_PAD), jnp.float32).at[:, :a].set(w3)
    b3p = jnp.zeros((1, ACT_PAD), jnp.float32).at[:, :a].set(b3)
    return (
        w1.astype(compute_dtype), b1.astype(jnp.float32),
        w2.astype(compute_dtype), b2.astype(jnp.float32),
        w3p.astype(compute_dtype), b3p.astype(jnp.float32),
    )


def stack_prepared_params(prepared_list):
    """Stack N prepared parameter sets along a new leading axis for the fused launch."""
    return jax.tree_util.tree_map(lambda *xs: jnp.stack(xs, axis=0), *prepared_list)


@functools.partial(jax.jit, static_argnames=("action_size", "tm"))
def td3_policy_forward(state, prepared_params, *, action_size, tm=None):
    """Single-network batched forward.  state: (B, S) f32 -> (B, action_size) f32."""
    w1, b1, w2, b2, w3p, b3p = prepared_params
    B, S = state.shape
    H1 = w1.shape[1]
    H2 = w2.shape[1]

    if tm is None:
        tm = _pick_tm(B)
    B_pad = _round_up(B, tm)
    x = state
    if B_pad != B:
        x = jnp.pad(x, ((0, B_pad - B), (0, 0)))

    out = pl.pallas_call(
        td3_policy_kernel,
        out_shape=jax.ShapeDtypeStruct((B_pad, ACT_PAD), jnp.float32),
        grid_spec=pltpu.PrefetchScalarGridSpec(
            num_scalar_prefetch=0,
            grid=(B_pad // tm,),
            in_specs=[
                pl.BlockSpec((tm, S), lambda i: (i, 0)),       # state: tiled on batch
                pl.BlockSpec((S, H1), lambda i: (0, 0)),       # weights/biases stay
                pl.BlockSpec((1, H1), lambda i: (0, 0)),       # VMEM-resident across
                pl.BlockSpec((H1, H2), lambda i: (0, 0)),      # grid steps (constant
                pl.BlockSpec((1, H2), lambda i: (0, 0)),       # index_map -> no re-DMA)
                pl.BlockSpec((H2, ACT_PAD), lambda i: (0, 0)),
                pl.BlockSpec((1, ACT_PAD), lambda i: (0, 0)),
            ],
            out_specs=pl.BlockSpec((tm, ACT_PAD), lambda i: (i, 0)),
        ),
        compiler_params=pltpu.CompilerParams(
            dimension_semantics=("parallel",),   # shards batch tiles across v7x TCs
        ),
        cost_estimate=_cost_estimate(1, B_pad, S, H1, H2),
    )(x, w1, b1, w2, b2, w3p, b3p)

    return out[:B, :action_size]


@functools.partial(jax.jit, static_argnames=("action_size", "tm"))
def td3_policy_forward_stacked(states, stacked_prepared, *, action_size, tm=None):
    """Fused forward for N stacked policies (e.g. both Tennis agents and their
    target actors) in a single pallas_call.  states: (N, B, S) f32."""
    w1, b1, w2, b2, w3p, b3p = stacked_prepared
    N, B, S = states.shape
    H1 = w1.shape[-1]
    H2 = w2.shape[-1]

    if tm is None:
        tm = _pick_tm(B)
    B_pad = _round_up(B, tm)
    x = states
    if B_pad != B:
        x = jnp.pad(x, ((0, 0), (0, B_pad - B), (0, 0)))

    out = pl.pallas_call(
        td3_policy_kernel,
        out_shape=jax.ShapeDtypeStruct((N, B_pad, ACT_PAD), jnp.float32),
        grid_spec=pltpu.PrefetchScalarGridSpec(
            num_scalar_prefetch=0,
            grid=(N, B_pad // tm),                             # net axis outer, batch inner
            in_specs=[
                pl.BlockSpec((None, tm, S), lambda n, i: (n, i, 0)),
                pl.BlockSpec((None, S, H1), lambda n, i: (n, 0, 0)),
                pl.BlockSpec((None, 1, H1), lambda n, i: (n, 0, 0)),
                pl.BlockSpec((None, H1, H2), lambda n, i: (n, 0, 0)),
                pl.BlockSpec((None, 1, H2), lambda n, i: (n, 0, 0)),
                pl.BlockSpec((None, H2, ACT_PAD), lambda n, i: (n, 0, 0)),
                pl.BlockSpec((None, 1, ACT_PAD), lambda n, i: (n, 0, 0)),
            ],
            out_specs=pl.BlockSpec((None, tm, ACT_PAD), lambda n, i: (n, i, 0)),
        ),
        compiler_params=pltpu.CompilerParams(
            dimension_semantics=("parallel", "parallel"),
        ),
        cost_estimate=_cost_estimate(N, B_pad, S, H1, H2),
    )(x, w1, b1, w2, b2, w3p, b3p)

    return out[:, :B, :action_size]


def init_td3_params(key, state_size, action_size, h1=128, h2=128):
    """Deterministic init mirroring the PyTorch module's reset_weights():
       fc1/fc2 weights ~ U(-1/sqrt(out_features), +1/sqrt(out_features))
       (hidden_init uses weight.size()[0] == out_features),
       fc3 weights ~ U(-3e-3, 3e-3),
       biases keep nn.Linear default U(-1/sqrt(in_features), +1/sqrt(in_features)).
    """
    ks = jax.random.split(key, 6)
    lim1 = 1.0 / math.sqrt(h1)
    lim2 = 1.0 / math.sqrt(h2)
    lim3 = 0.003
    blim1 = 1.0 / math.sqrt(state_size)
    blim2 = 1.0 / math.sqrt(h1)
    blim3 = 1.0 / math.sqrt(h2)

    w1 = jax.random.uniform(ks[0], (state_size, h1), jnp.float32, -lim1, lim1)
    b1 = jax.random.uniform(ks[1], (1, h1), jnp.float32, -blim1, blim1)
    w2 = jax.random.uniform(ks[2], (h1, h2), jnp.float32, -lim2, lim2)
    b2 = jax.random.uniform(ks[3], (1, h2), jnp.float32, -blim2, blim2)
    w3 = jax.random.uniform(ks[4], (h2, action_size), jnp.float32, -lim3, lim3)
    b3 = jax.random.uniform(ks[5], (1, action_size), jnp.float32, -blim3, blim3)
    return (w1, b1, w2, b2, w3, b3)


def td3_policy_ref(state, params):
    """Pure-JAX f32 reference for correctness check (kernel uses bf16 MXU inputs)."""
    w1, b1, w2, b2, w3, b3 = params
    x = jnp.maximum(state @ w1 + b1, 0.0)
    x = jnp.maximum(x @ w2 + b2, 0.0)
    return jnp.tanh(x @ w3 + b3)


if __name__ == "__main__":
    # Tennis env: state_size=24, action_size=2; small inference batch.
    batch, state_size, action_size = 8, 24, 2

    key = jax.random.PRNGKey(0)
    pkey, skey, pkey2, skey2 = jax.random.split(key, 4)

    params = init_td3_params(pkey, state_size, action_size, h1=128, h2=128)
    prepared = prepare_td3_params(params)
    state = jax.random.normal(skey, (batch, state_size), jnp.float32)

    out = jax.block_until_ready(
        td3_policy_forward(state, prepared, action_size=action_size))
    ref = td3_policy_ref(state, params)
    assert out.shape == (batch, action_size)
    assert jnp.allclose(out, ref, atol=5e-3, rtol=1e-2), \
        float(jnp.max(jnp.abs(out - ref)))

    # Multi-tile batch-grid path: B=272 -> tm=136, grid=2, zero padding overshoot.
    big_state = jax.random.normal(skey2, (272, state_size), jnp.float32)
    out_big = jax.block_until_ready(
        td3_policy_forward(big_state, prepared, action_size=action_size))
    ref_big = td3_policy_ref(big_state, params)
    assert out_big.shape == (272, action_size)
    assert jnp.allclose(out_big, ref_big, atol=5e-3, rtol=1e-2), \
        float(jnp.max(jnp.abs(out_big - ref_big)))

    # Fused launch: 2 Tennis agents x (actor + target actor) = 4 nets, one pallas_call.
    params_b = init_td3_params(pkey2, state_size, action_size, h1=128, h2=128)
    nets = [params, params_b, params, params_b]
    stacked = stack_prepared_params([prepare_td3_params(p) for p in nets])
    states4 = jax.random.normal(jax.random.PRNGKey(7), (4, batch, state_size), jnp.float32)
    out4 = jax.block_until_ready(
        td3_policy_forward_stacked(states4, stacked, action_size=action_size))
    assert out4.shape == (4, batch, action_size)
    for n, p in enumerate(nets):
        ref_n = td3_policy_ref(states4[n], p)
        assert jnp.allclose(out4[n], ref_n, atol=5e-3, rtol=1e-2), \
            (n, float(jnp.max(jnp.abs(out4[n] - ref_n))))

    # TODO(synk): optional v5e-only tweak: emit the padded output slab in bf16 (or
    # transpose the last layer) to shrink the (tm,128) writeback stream further.
    print("KERNEL_OK")
</pallas_src>

<mosaic_0001>
module attributes {stable_mosaic.version = 11 : i64} {
  func.func @td3_policy_kernel(%arg0: i32, %arg1: memref<8x24xf32, #tpu.memory_space<vmem>>, %arg2: memref<24x128xbf16, #tpu.memory_space<vmem>>, %arg3: memref<1x128xf32, #tpu.memory_space<vmem>>, %arg4: memref<128x128xbf16, #tpu.memory_space<vmem>>, %arg5: memref<1x128xf32, #tpu.memory_space<vmem>>, %arg6: memref<128x128xbf16, #tpu.memory_space<vmem>>, %arg7: memref<1x128xf32, #tpu.memory_space<vmem>>, %arg8: memref<8x128xf32, #tpu.memory_space<vmem>>) attributes {dimension_semantics = [#tpu.dimension_semantics<parallel>], iteration_bounds = array<i64: 1>, scalar_prefetch = 0 : i64, scratch_operands = 0 : i64, tpu.core_type = #tpu.core_type<tc>, window_params = [{transform_indices = @transform_0, window_bounds = array<i64: 8, 24>}, {pipeline_mode = #tpu.pipeline_mode<synchronous>, transform_indices = @transform_1, window_bounds = array<i64: 24, 128>}, {pipeline_mode = #tpu.pipeline_mode<synchronous>, transform_indices = @transform_2, window_bounds = array<i64: 1, 128>}, {pipeline_mode = #tpu.pipeline_mode<synchronous>, transform_indices = @transform_3, window_bounds = array<i64: 128, 128>}, {pipeline_mode = #tpu.pipeline_mode<synchronous>, transform_indices = @transform_4, window_bounds = array<i64: 1, 128>}, {pipeline_mode = #tpu.pipeline_mode<synchronous>, transform_indices = @transform_5, window_bounds = array<i64: 128, 128>}, {pipeline_mode = #tpu.pipeline_mode<synchronous>, transform_indices = @transform_6, window_bounds = array<i64: 1, 128>}, {transform_indices = @transform_7, window_bounds = array<i64: 8, 128>}]} {
    %c0 = arith.constant 0 : index
    %c0_0 = arith.constant 0 : index
    %0 = vector.load %arg1[%c0, %c0_0] : memref<8x24xf32, #tpu.memory_space<vmem>>, vector<8x24xf32>
    %1 = arith.truncf %0 : vector<8x24xf32> to vector<8x24xbf16>
    %c0_1 = arith.constant 0 : index
    %c0_2 = arith.constant 0 : index
    %2 = vector.load %arg2[%c0_1, %c0_2] : memref<24x128xbf16, #tpu.memory_space<vmem>>, vector<24x128xbf16>
    %cst = arith.constant dense<0.000000e+00> : vector<8x128xf32>
    %3 = tpu.matmul %1, %2, %cst {dimension_numbers = #tpu.dot_dimension_numbers<[1], [0], [0], [1], [0, 0, 1, 1], [], []>} : vector<8x24xbf16>, vector<24x128xbf16>, vector<8x128xf32> -> vector<8x128xf32>
    %c0_3 = arith.constant 0 : index
    %c0_4 = arith.constant 0 : index
    %4 = vector.load %arg3[%c0_3, %c0_4] : memref<1x128xf32, #tpu.memory_space<vmem>>, vector<1x128xf32>
    %5 = vector.broadcast %4 : vector<1x128xf32> to vector<8x128xf32>
    %6 = arith.addf %3, %5 : vector<8x128xf32>
    %cst_5 = arith.constant 0.000000e+00 : f32
    %7 = vector.broadcast %cst_5 : f32 to vector<8x128xf32>
    %8 = arith.maximumf %6, %7 : vector<8x128xf32>
    %9 = arith.truncf %8 : vector<8x128xf32> to vector<8x128xbf16>
    %c0_6 = arith.constant 0 : index
    %c0_7 = arith.constant 0 : index
    %10 = vector.load %arg4[%c0_6, %c0_7] : memref<128x128xbf16, #tpu.memory_space<vmem>>, vector<128x128xbf16>
    %cst_8 = arith.constant dense<0.000000e+00> : vector<8x128xf32>
    %11 = tpu.matmul %9, %10, %cst_8 {dimension_numbers = #tpu.dot_dimension_numbers<[1], [0], [0], [1], [0, 0, 1, 1], [], []>} : vector<8x128xbf16>, vector<128x128xbf16>, vector<8x128xf32> -> vector<8x128xf32>
    %c0_9 = arith.constant 0 : index
    %c0_10 = arith.constant 0 : index
    %12 = vector.load %arg5[%c0_9, %c0_10] : memref<1x128xf32, #tpu.memory_space<vmem>>, vector<1x128xf32>
    %13 = vector.broadcast %12 : vector<1x128xf32> to vector<8x128xf32>
    %14 = arith.addf %11, %13 : vector<8x128xf32>
    %cst_11 = arith.constant 0.000000e+00 : f32
    %15 = vector.broadcast %cst_11 : f32 to vector<8x128xf32>
    %16 = arith.maximumf %14, %15 : vector<8x128xf32>
    %17 = arith.truncf %16 : vector<8x128xf32> to vector<8x128xbf16>
    %c0_12 = arith.constant 0 : index
    %c0_13 = arith.constant 0 : index
    %18 = vector.load %arg6[%c0_12, %c0_13] : memref<128x128xbf16, #tpu.memory_space<vmem>>, vector<128x128xbf16>
    %cst_14 = arith.constant dense<0.000000e+00> : vector<8x128xf32>
    %19 = tpu.matmul %17, %18, %cst_14 {dimension_numbers = #tpu.dot_dimension_numbers<[1], [0], [0], [1], [0, 0, 1, 1], [], []>} : vector<8x128xbf16>, vector<128x128xbf16>, vector<8x128xf32> -> vector<8x128xf32>
    %c0_15 = arith.constant 0 : index
    %c0_16 = arith.constant 0 : index
    %20 = vector.load %arg7[%c0_15, %c0_16] : memref<1x128xf32, #tpu.memory_space<vmem>>, vector<1x128xf32>
    %21 = vector.broadcast %20 : vector<1x128xf32> to vector<8x128xf32>
    %22 = arith.addf %19, %21 : vector<8x128xf32>
    %23 = math.tanh %22 : vector<8x128xf32>
    %c0_17 = arith.constant 0 : index
    %c0_18 = arith.constant 0 : index
    %24 = vector.load %arg8[%c0_17, %c0_18] : memref<8x128xf32, #tpu.memory_space<vmem>>, vector<8x128xf32>
    tpu.vector_store %arg8[%c0_17, %c0_18], %23 {strides = array<i32>} : memref<8x128xf32, #tpu.memory_space<vmem>>, vector<8x128xf32>,
    return
  }
  func.func @transform_0(%arg0: i32) -> (i32, i32) {
    %c0_i32 = arith.constant 0 : i32
    %c0_i32_0 = arith.constant 0 : i32
    return %arg0, %c0_i32 : i32, i32
  }
  func.func @transform_1(%arg0: i32) -> (i32, i32) {
    %c0_i32 = arith.constant 0 : i32
    %c0_i32_0 = arith.constant 0 : i32
    %c0_i32_1 = arith.constant 0 : i32
    return %c0_i32, %c0_i32_0 : i32, i32
  }
  func.func @transform_2(%arg0: i32) -> (i32, i32) {
    %c0_i32 = arith.constant 0 : i32
    %c0_i32_0 = arith.constant 0 : i32
    %c0_i32_1 = arith.constant 0 : i32
    return %c0_i32, %c0_i32_0 : i32, i32
  }
  func.func @transform_3(%arg0: i32) -> (i32, i32) {
    %c0_i32 = arith.constant 0 : i32
    %c0_i32_0 = arith.constant 0 : i32
    %c0_i32_1 = arith.constant 0 : i32
    return %c0_i32, %c0_i32_0 : i32, i32
  }
  func.func @transform_4(%arg0: i32) -> (i32, i32) {
    %c0_i32 = arith.constant 0 : i32
    %c0_i32_0 = arith.constant 0 : i32
    %c0_i32_1 = arith.constant 0 : i32
    return %c0_i32, %c0_i32_0 : i32, i32
  }
  func.func @transform_5(%arg0: i32) -> (i32, i32) {
    %c0_i32 = arith.constant 0 : i32
    %c0_i32_0 = arith.constant 0 : i32
    %c0_i32_1 = arith.constant 0 : i32
    return %c0_i32, %c0_i32_0 : i32, i32
  }
  func.func @transform_6(%arg0: i32) -> (i32, i32) {
    %c0_i32 = arith.constant 0 : i32
    %c0_i32_0 = arith.constant 0 : i32
    %c0_i32_1 = arith.constant 0 : i32
    return %c0_i32, %c0_i32_0 : i32, i32
  }
  func.func @transform_7(%arg0: i32) -> (i32, i32) {
    %c0_i32 = arith.constant 0 : i32
    %c0_i32_0 = arith.constant 0 : i32
    return %arg0, %c0_i32 : i32, i32
  }
}

</mosaic_0001>

<llo_original>
// kernel: td3_policy_forward.1
$region0: #{td3_policy_forward.1}
  #allocation0 [shape = 'u32[]', space=smem, size = 0x4, offset = 0x4, fixed_abs, tag = 'smem constant byte address 0x4 - core index']
  #allocation1 [shape = 'u32[144,128]{1,0:T(1,128)}', space=vmem, size = 0x12000, scoped, tag = 'internal scratch']
  %s0 = inlined_call_operand.hbm [shape: f32[8,24], index: 0, kind: input, shape index: {}]
  %s1 = inlined_call_operand.hbm [shape: bf16[24,128], index: 1, kind: input, shape index: {}]
  %s2 = inlined_call_operand.vmem [shape: f32[1,128], index: 2, kind: input, shape index: {}]
  %s3 = inlined_call_operand.hbm [shape: bf16[128,128], index: 3, kind: input, shape index: {}]
  %s4 = inlined_call_operand.vmem [shape: f32[1,128], index: 4, kind: input, shape index: {}]
  %s5 = inlined_call_operand.hbm [shape: bf16[128,128], index: 5, kind: input, shape index: {}]
  %s6 = inlined_call_operand.vmem [shape: f32[1,128], index: 6, kind: input, shape index: {}]
  %s7 = inlined_call_operand.vmem [shape: f32[8,128], index: 7, kind: output, shape index: {}]
  %s8 = sld [smem:[#allocation0]]
  $region54: #{td3_policy_forward.1} parent=0
    _
  %s10 = ssub.s32 1, %s8
  %s11 = scalar_select 0, %s10, %s8
  $region1: #{td3_policy_forward.1} parent=0
    #allocation2 [shape = 'u8[4096]{0}', space=vmem, size = 0x1000, scoped, tag = 'input window, operand 0, single buffered']
    #allocation3 [shape = 's32[1]{0}', space=sflag, size = 0x4, scoped, tag = 'scoped memory for td3_policy_forward.1']
    #allocation4 [shape = 'u8[6144]{0}', space=vmem, size = 0x1800, scoped, tag = 'input window, operand 1, single buffered']
    #allocation5 [shape = 's32[1]{0}', space=sflag, size = 0x4, scoped, tag = 'scoped memory for td3_policy_forward.1']
    #allocation6 [shape = 'u8[32768]{0}', space=vmem, size = 0x8000, scoped, tag = 'input window, operand 3, single buffered']
    #allocation7 [shape = 'u8[32768]{0}', space=vmem, size = 0x8000, scoped, tag = 'input window, operand 5, single buffered']
    #allocation8 [shape = 's32[1]{0}', space=sflag, size = 0x4, scoped, tag = 'scoped memory for td3_policy_forward.1']
    %12 = vsyncpa [#allocation3], 0
    %13 = vsyncpa [#allocation5], 0
    %14 = vsyncpa [#allocation8], 0
    // Predicated region
    $region2: #{td3_policy_forward.1} parent=1 // pred_check
      _
    $region3: #{td3_policy_forward.1} parent=1 // pred_check_branch
      %16 = sbr.rel (0) target = $region5
    $region4: #{td3_policy_forward.1} parent=1 // pred_region
      %s18 = ssub.s32 128, 128
      %19 = vsyncadd [#allocation3], %s18
      %s21 = sshll.u32 [#allocation2], 4
      %s22 = int_to_ptr.vmem [resolvable:$true] %s21
      %24 = dma.hbm_to_vmem [thread:$0]  %s0, 128, %s22, [#allocation3]
    $region5: #{td3_policy_forward.1} parent=1 // pred_fallthru
      _
    // Predicated region
    $region6: #{td3_policy_forward.1} parent=1 // pred_check
      _
    $region7: #{td3_policy_forward.1} parent=1 // pred_check_branch
      %26 = sbr.rel (0) target = $region9
    $region8: #{td3_policy_forward.1} parent=1 // pred_region
      %s28 = ssub.s32 192, 192
      %29 = vsyncadd [#allocation5], %s28
      %s30 = sshll.u32 [#allocation4], 4
      %s31 = int_to_ptr.vmem [resolvable:$true] %s30
      %36 = dma.hbm_to_vmem [thread:$0]  %s1, 192, %s31, [#allocation5], 64, 64, 4
    $region9: #{td3_policy_forward.1} parent=1 // pred_fallthru
      _
    // Predicated region
    $region10: #{td3_policy_forward.1} parent=1 // pred_check
      _
    $region11: #{td3_policy_forward.1} parent=1 // pred_check_branch
      %38 = sbr.rel (0) target = $region13
    $region12: #{td3_policy_forward.1} parent=1 // pred_region
      _
    $region13: #{td3_policy_forward.1} parent=1 // pred_fallthru
      _
    // Predicated region
    $region14: #{td3_policy_forward.1} parent=1 // pred_check
      _
    $region15: #{td3_policy_forward.1} parent=1 // pred_check_branch
      %40 = sbr.rel (0) target = $region17
    $region16: #{td3_policy_forward.1} parent=1 // pred_region
      %s42 = ssub.s32 1024, 1024
      %43 = vsyncadd [#allocation5], %s42
      %s44 = sshll.u32 [#allocation6], 4
      %s45 = int_to_ptr.vmem [resolvable:$true] %s44
      %50 = dma.hbm_to_vmem [thread:$0]  %s3, 1024, %s45, [#allocation5], 64, 64, 4
    $region17: #{td3_policy_forward.1} parent=1 // pred_fallthru
      _
    // Predicated region
    $region18: #{td3_policy_forward.1} parent=1 // pred_check
      _
    $region19: #{td3_policy_forward.1} parent=1 // pred_check_branch
      %52 = sbr.rel (0) target = $region21
    $region20: #{td3_policy_forward.1} parent=1 // pred_region
      _
    $region21: #{td3_policy_forward.1} parent=1 // pred_fallthru
      _
    // Predicated region
    $region22: #{td3_policy_forward.1} parent=1 // pred_check
      _
    $region23: #{td3_policy_forward.1} parent=1 // pred_check_branch
      %54 = sbr.rel (0) target = $region25
    $region24: #{td3_policy_forward.1} parent=1 // pred_region
      %s56 = ssub.s32 1024, 1024
      %57 = vsyncadd [#allocation8], %s56
      %s58 = sshll.u32 [#allocation7], 4
      %s59 = int_to_ptr.vmem [resolvable:$true] %s58
      %64 = dma.hbm_to_vmem [thread:$0]  %s5, 1024, %s59, [#allocation8], 64, 64, 4
    $region25: #{td3_policy_forward.1} parent=1 // pred_fallthru
      _
    // Predicated region
    $region26: #{td3_policy_forward.1} parent=1 // pred_check
      _
    $region27: #{td3_policy_forward.1} parent=1 // pred_check_branch
      %66 = sbr.rel (0) target = $region29
    $region28: #{td3_policy_forward.1} parent=1 // pred_region
      _
    $region29: #{td3_policy_forward.1} parent=1 // pred_fallthru
      _
    // Predicated region
    $region30: #{td3_policy_forward.1} parent=1 // pred_check
      _
    $region31: #{td3_policy_forward.1} parent=1 // pred_check_branch
      %68 = sbr.rel (0) target = $region33
    $region32: #{td3_policy_forward.1} parent=1 // pred_region
      %69 = dma.done [#allocation3], 128
    $region33: #{td3_policy_forward.1} parent=1 // pred_fallthru
      _
    // Predicated region
    $region34: #{td3_policy_forward.1} parent=1 // pred_check
      _
    $region35: #{td3_policy_forward.1} parent=1 // pred_check_branch
      %71 = sbr.rel (0) target = $region37
    $region36: #{td3_policy_forward.1} parent=1 // pred_region
      %72 = dma.done [#allocation5], 192
    $region37: #{td3_policy_forward.1} parent=1 // pred_fallthru
      _
    // Predicated region
    $region38: #{td3_policy_forward.1} parent=1 // pred_check
      _
    $region39: #{td3_policy_forward.1} parent=1 // pred_check_branch
      %74 = sbr.rel (0) target = $region41
    $region40: #{td3_policy_forward.1} parent=1 // pred_region
      %75 = dma.done [#allocation5], 1024
    $region41: #{td3_policy_forward.1} parent=1 // pred_fallthru
      _
    // Predicated region
    $region42: #{td3_policy_forward.1} parent=1 // pred_check
      _
    $region43: #{td3_policy_forward.1} parent=1 // pred_check_branch
      %77 = sbr.rel (0) target = $region45
    $region44: #{td3_policy_forward.1} parent=1 // pred_region
      %78 = dma.done [#allocation8], 1024
    $region45: #{td3_policy_forward.1} parent=1 // pred_fallthru
      _
    %v80 = vld [vmem:[#allocation2] sm:$0xff]
    %v81 = vpack.c.bf16 %v80, %v80
    %v82 = vld [vmem:[#allocation4] sm:$0xf]
    %v83 = vld [vmem:[#allocation4 + $0x4] sm:$0xf]
    %v84 = vld [vmem:[#allocation4 + $0x8] sm:$0xf]
    %v85 = vld [vmem:[%s2] sm:$0x1]
    %v87 = vlaneseq
    %v88 = vshrl.u32 %v87, 7
    %v89 = vsub.s32 0, %v88
    %v90 = vrot.slane %v85, %v89
    %v95 = vunpack.c.l.b16 %v82
    %v96 = vunpack.c.l.b16 %v83
    %v97 = vunpack.c.l.b16 %v84
    %v98 = vpack.c.b16 %v96, %v95
    %v99 = vpack.c.b16 %v97, %v97
    %vm101 = vcmask 195584
    %v103 = vsel %vm101, %v81, 0
    %vm105 = vcmask 1043456
    %v107 = vsel %vm105, %v99, 0
    %109 = vmatprep.subr.bf16.mxu0 0
    %110 = vmatpush1.bf16.msra.mxu0 %v98
    %111 = vmatprep.subr.bf16.mxu0 0
    %112 = vmatpush1.bf16.msra.mxu0 %v107
    %113 = vmatprep.subr.bf16.mxu0 0
    %114 = vmatpush1.bf16.msra.mxu0 0
    %115 = vmatprep.subr.bf16.mxu0 0
    %116 = vmatpush1.bf16.msra.mxu0 0
    %117 = vmatprep.subr.bf16.mxu0 0
    %118 = vmatpush1.bf16.msra.mxu0 0
    %119 = vmatprep.subr.bf16.mxu0 0
    %120 = vmatpush1.bf16.msra.mxu0 0
    %121 = vmatprep.subr.bf16.mxu0 0
    %122 = vmatpush1.bf16.msra.mxu0 0
    %123 = vmatprep.subr.bf16.mxu0 0
    %124 = vmatpush1.bf16.msra.mxu0 0
    %125 = vmatprep.subr.bf16.mxu0 0
    %126 = vmatpush1.bf16.msra.mxu0 0
    %127 = vmatprep.subr.bf16.mxu0 0
    %128 = vmatpush1.bf16.msra.mxu0 0
    %129 = vmatprep.subr.bf16.mxu0 0
    %130 = vmatpush1.bf16.msra.mxu0 0
    %131 = vmatprep.subr.bf16.mxu0 0
    %132 = vmatpush1.bf16.msra.mxu0 0
    %133 = vmatprep.subr.bf16.mxu0 0
    %134 = vmatpush1.bf16.msra.mxu0 0
    %135 = vmatprep.subr.bf16.mxu0 0
    %136 = vmatpush1.bf16.msra.mxu0 0
    %137 = vmatprep.subr.bf16.mxu0 0
    %138 = vmatpush1.bf16.msra.mxu0 0
    %139 = vmatprep.subr.bf16.mxu0 0
    %140 = vmatpush1.bf16.msra.mxu0 0
    %141 = vmatprep.mubr.bf16.mxu0 0
    %142 = vmatmul.mubr.bf16.gmra.mrb[0].mxu0 %v103
    %v143 = vpop.f32.mrb[0].mxu0
    %v144 = vadd.f32 %v90, %v143
    %v145 = vpop.f32.mrb[0].mxu0
    %v146 = vpop.f32.mrb[0].mxu0
    %v147 = vpop.f32.mrb[0].mxu0
    %148 = vdwg.mxu0
    %v149 = vmax.f32 %v144, 0.0
    %v150 = vpack.c.bf16 %v149, %v149
    %v151 = vld [vmem:[#allocation6] sm:$0xf]
    %v152 = vld [vmem:[#allocation6 + $0x4] sm:$0xf]
    %v153 = vld [vmem:[#allocation6 + $0x8] sm:$0xf]
    %v154 = vld [vmem:[#allocation6 + $0xc] sm:$0xf]
    %v155 = vld [vmem:[#allocation6 + $0x10] sm:$0xf]
    %v156 = vld [vmem:[#allocation6 + $0x14] sm:$0xf]
    %v157 = vld [vmem:[#allocation6 + $0x18] sm:$0xf]
    %v158 = vld [vmem:[#allocation6 + $0x1c] sm:$0xf]
    %v159 = vld [vmem:[#allocation6 + $0x20] sm:$0xf]
    %v160 = vld [vmem:[#allocation6 + $0x24] sm:$0xf]
    %v161 = vld [vmem:[#allocation6 + $0x28] sm:$0xf]
    %v162 = vld [vmem:[#allocation6 + $0x2c] sm:$0xf]
    %v163 = vld [vmem:[#allocation6 + $0x30] sm:$0xf]
    %v164 = vld [vmem:[#allocation6 + $0x34] sm:$0xf]
    %v165 = vld [vmem:[#allocation6 + $0x38] sm:$0xf]
    %v166 = vld [vmem:[#allocation6 + $0x3c] sm:$0xf]
    %v167 = vld [vmem:[%s4] sm:$0x1]
    %v169 = vlaneseq
    %v170 = vshrl.u32 %v169, 7
    %v171 = vsub.s32 0, %v170
    %v172 = vrot.slane %v167, %v171
    %v190 = vunpack.c.l.b16 %v151
    %v191 = vunpack.c.l.b16 %v152
    %v192 = vunpack.c.l.b16 %v153
    %v193 = vunpack.c.l.b16 %v154
    %v194 = vunpack.c.l.b16 %v155
    %v195 = vunpack.c.l.b16 %v156
    %v196 = vunpack.c.l.b16 %v157
    %v197 = vunpack.c.l.b16 %v158
    %v198 = vunpack.c.l.b16 %v159
    %v199 = vunpack.c.l.b16 %v160
    %v200 = vunpack.c.l.b16 %v161
    %v201 = vunpack.c.l.b16 %v162
    %v202 = vunpack.c.l.b16 %v163
    %v203 = vunpack.c.l.b16 %v164
    %v204 = vunpack.c.l.b16 %v165
    %v205 = vunpack.c.l.b16 %v166
    %v206 = vpack.c.b16 %v191, %v190
    %v207 = vpack.c.b16 %v193, %v192
    %v208 = vpack.c.b16 %v195, %v194
    %v209 = vpack.c.b16 %v197, %v196
    %v210 = vpack.c.b16 %v199, %v198
    %v211 = vpack.c.b16 %v201, %v200
    %v212 = vpack.c.b16 %v203, %v202
    %v213 = vpack.c.b16 %v205, %v204
    %222 = vmatprep.subr.bf16.mxu0 0
    %223 = vmatpush1.bf16.msra.mxu0 %v206
    %224 = vmatprep.subr.bf16.mxu0 0
    %225 = vmatpush1.bf16.msra.mxu0 %v207
    %226 = vmatprep.subr.bf16.mxu0 0
    %227 = vmatpush1.bf16.msra.mxu0 %v208
    %228 = vmatprep.subr.bf16.mxu0 0
    %229 = vmatpush1.bf16.msra.mxu0 %v209
    %230 = vmatprep.subr.bf16.mxu0 0
    %231 = vmatpush1.bf16.msra.mxu0 %v210
    %232 = vmatprep.subr.bf16.mxu0 0
    %233 = vmatpush1.bf16.msra.mxu0 %v211
    %234 = vmatprep.subr.bf16.mxu0 0
    %235 = vmatpush1.bf16.msra.mxu0 %v212
    %236 = vmatprep.subr.bf16.mxu0 0
    %237 = vmatpush1.bf16.msra.mxu0 %v213
    %238 = vmatprep.subr.bf16.mxu0 0
    %239 = vmatpush1.bf16.msra.mxu0 0
    %240 = vmatprep.subr.bf16.mxu0 0
    %241 = vmatpush1.bf16.msra.mxu0 0
    %242 = vmatprep.subr.bf16.mxu0 0
    %243 = vmatpush1.bf16.msra.mxu0 0
    %244 = vmatprep.subr.bf16.mxu0 0
    %245 = vmatpush1.bf16.msra.mxu0 0
    %246 = vmatprep.subr.bf16.mxu0 0
    %247 = vmatpush1.bf16.msra.mxu0 0
    %248 = vmatprep.subr.bf16.mxu0 0
    %249 = vmatpush1.bf16.msra.mxu0 0
    %250 = vmatprep.subr.bf16.mxu0 0
    %251 = vmatpush1.bf16.msra.mxu0 0
    %252 = vmatprep.subr.bf16.mxu0 0
    %253 = vmatpush1.bf16.msra.mxu0 0
    %254 = vmatprep.mubr.bf16.mxu0 0
    %255 = vmatmul.mubr.bf16.gmra.mrb[0].mxu0 %v150
    %v256 = vpop.f32.mrb[0].mxu0
    %v257 = vadd.f32 %v172, %v256
    %v258 = vpop.f32.mrb[0].mxu0
    %v259 = vpop.f32.mrb[0].mxu0
    %v260 = vpop.f32.mrb[0].mxu0
    %261 = vdwg.mxu0
    %v262 = vmax.f32 %v257, 0.0
    %v263 = vpack.c.bf16 %v262, %v262
    %v264 = vld [vmem:[#allocation7] sm:$0xf]
    %v265 = vld [vmem:[#allocation7 + $0x4] sm:$0xf]
    %v266 = vld [vmem:[#allocation7 + $0x8] sm:$0xf]
    %v267 = vld [vmem:[#allocation7 + $0xc] sm:$0xf]
    %v268 = vld [vmem:[#allocation7 + $0x10] sm:$0xf]
    %v269 = vld [vmem:[#allocation7 + $0x14] sm:$0xf]
    %v270 = vld [vmem:[#allocation7 + $0x18] sm:$0xf]
    %v271 = vld [vmem:[#allocation7 + $0x1c] sm:$0xf]
    %v272 = vld [vmem:[#allocation7 + $0x20] sm:$0xf]
    %v273 = vld [vmem:[#allocation7 + $0x24] sm:$0xf]
    %v274 = vld [vmem:[#allocation7 + $0x28] sm:$0xf]
    %v275 = vld [vmem:[#allocation7 + $0x2c] sm:$0xf]
    %v276 = vld [vmem:[#allocation7 + $0x30] sm:$0xf]
    %v277 = vld [vmem:[#allocation7 + $0x34] sm:$0xf]
    %v278 = vld [vmem:[#allocation7 + $0x38] sm:$0xf]
    %v279 = vld [vmem:[#allocation7 + $0x3c] sm:$0xf]
    %v280 = vld [vmem:[%s6] sm:$0x1]
    %v282 = vlaneseq
    %v283 = vshrl.u32 %v282, 7
    %v284 = vsub.s32 0, %v283
    %v285 = vrot.slane %v280, %v284
    %v303 = vunpack.c.l.b16 %v264
    %v304 = vunpack.c.l.b16 %v265
    %v305 = vunpack.c.l.b16 %v266
    %v306 = vunpack.c.l.b16 %v267
    %v307 = vunpack.c.l.b16 %v268
    %v308 = vunpack.c.l.b16 %v269
    %v309 = vunpack.c.l.b16 %v270
    %v310 = vunpack.c.l.b16 %v271
    %v311 = vunpack.c.l.b16 %v272
    %v312 = vunpack.c.l.b16 %v273
    %v313 = vunpack.c.l.b16 %v274
    %v314 = vunpack.c.l.b16 %v275
    %v315 = vunpack.c.l.b16 %v276
    %v316 = vunpack.c.l.b16 %v277
    %v317 = vunpack.c.l.b16 %v278
    %v318 = vunpack.c.l.b16 %v279
    %v319 = vpack.c.b16 %v304, %v303
    %v320 = vpack.c.b16 %v306, %v305
    %v321 = vpack.c.b16 %v308, %v307
    %v322 = vpack.c.b16 %v310, %v309
    %v323 = vpack.c.b16 %v312, %v311
    %v324 = vpack.c.b16 %v314, %v313
    %v325 = vpack.c.b16 %v316, %v315
    %v326 = vpack.c.b16 %v318, %v317
    %335 = vmatprep.subr.bf16.mxu0 0
    %336 = vmatpush1.bf16.msra.mxu0 %v319
    %337 = vmatprep.subr.bf16.mxu0 0
    %338 = vmatpush1.bf16.msra.mxu0 %v320
    %339 = vmatprep.subr.bf16.mxu0 0
    %340 = vmatpush1.bf16.msra.mxu0 %v321
    %341 = vmatprep.subr.bf16.mxu0 0
    %342 = vmatpush1.bf16.msra.mxu0 %v322
    %343 = vmatprep.subr.bf16.mxu0 0
    %344 = vmatpush1.bf16.msra.mxu0 %v323
    %345 = vmatprep.subr.bf16.mxu0 0
    %346 = vmatpush1.bf16.msra.mxu0 %v324
    %347 = vmatprep.subr.bf16.mxu0 0
    %348 = vmatpush1.bf16.msra.mxu0 %v325
    %349 = vmatprep.subr.bf16.mxu0 0
    %350 = vmatpush1.bf16.msra.mxu0 %v326
    %351 = vmatprep.subr.bf16.mxu0 0
    %352 = vmatpush1.bf16.msra.mxu0 0
    %353 = vmatprep.subr.bf16.mxu0 0
    %354 = vmatpush1.bf16.msra.mxu0 0
    %355 = vmatprep.subr.bf16.mxu0 0
    %356 = vmatpush1.bf16.msra.mxu0 0
    %357 = vmatprep.subr.bf16.mxu0 0
    %358 = vmatpush1.bf16.msra.mxu0 0
    %359 = vmatprep.subr.bf16.mxu0 0
    %360 = vmatpush1.bf16.msra.mxu0 0
    %361 = vmatprep.subr.bf16.mxu0 0
    %362 = vmatpush1.bf16.msra.mxu0 0
    %363 = vmatprep.subr.bf16.mxu0 0
    %364 = vmatpush1.bf16.msra.mxu0 0
    %365 = vmatprep.subr.bf16.mxu0 0
    %366 = vmatpush1.bf16.msra.mxu0 0
    %367 = vmatprep.mubr.bf16.mxu0 0
    %368 = vmatmul.mubr.bf16.gmra.mrb[0].mxu0 %v263
    %v369 = vpop.f32.mrb[0].mxu0
    %v370 = vadd.f32 %v285, %v369
    %v371 = vpop.f32.mrb[0].mxu0
    %v372 = vpop.f32.mrb[0].mxu0
    %v373 = vpop.f32.mrb[0].mxu0
    %374 = vdwg.mxu0
    %v375 = vtanh.pop %v370
    %376 = vst [vmem:[%s7] sm:$0xff] %v375
    // Predicated region
    $region46: #{td3_policy_forward.1} parent=1 // pred_check
      _
    $region47: #{td3_policy_forward.1} parent=1 // pred_check_branch
      %378 = sbr.rel (0) target = $region49
    $region48: #{td3_policy_forward.1} parent=1 // pred_region
      _
    $region49: #{td3_policy_forward.1} parent=1 // pred_fallthru
      _
    // Predicated region
    $region50: #{td3_policy_forward.1} parent=1 // pred_check
      _
    $region51: #{td3_policy_forward.1} parent=1 // pred_check_branch
      %380 = sbr.rel (0) target = $region53
    $region52: #{td3_policy_forward.1} parent=1 // pred_region
      _
    $region53: #{td3_policy_forward.1} parent=1 // pred_fallthru
      _
    %381 = vsyncpa [#allocation3], 1
    %382 = vsyncpa [#allocation5], 1
    %383 = vsyncpa [#allocation8], 1

</llo_original>
